<compile_context>
chip_gen: v5e
topology: v5e:2x2
jax: 0.10.0
libtpu: 0.0.40
codegen_flags: <defaults>
</compile_context>

<pallas_src>
import math
import functools

import numpy as np
import jax
import jax.numpy as jnp
from jax.experimental import pallas as pl
from jax.experimental.pallas import tpu as pltpu


# ---------------------------------------------------------------------------
# Constants
# ---------------------------------------------------------------------------
_SSIM_WIN = 11
_SSIM_SIGMA = 1.5
_GRAY = (0.299, 0.587, 0.114)
_SOBEL_X = ((-1.0, 0.0, 1.0), (-2.0, 0.0, 2.0), (-1.0, 0.0, 1.0))
_SOBEL_Y = ((-1.0, -2.0, -1.0), (0.0, 0.0, 0.0), (1.0, 2.0, 1.0))


def _gaussian_1d(size, sigma):
    c = (size - 1) / 2.0
    w = [math.exp(-((i - c) ** 2) / (2.0 * sigma * sigma)) for i in range(size)]
    s = sum(w)
    return tuple(v / s for v in w)


_GAUSS = _gaussian_1d(_SSIM_WIN, _SSIM_SIGMA)


# ---------------------------------------------------------------------------
# Banded / block matrices (built once per (H, W) with numpy, become compile-time
# constants).  Valid cross-correlation with a separable kernel v (vertical) x
# h (horizontal) is  L @ img @ R  with L[i, i+k] = v[k] and R[j+k, j] = h[k].
# ---------------------------------------------------------------------------
def _band_left(out_rows, in_rows, taps):
    m = np.zeros((out_rows, in_rows), np.float32)
    rows = np.arange(out_rows)
    for k, t in enumerate(taps):
        t = float(t)
        if t != 0.0:
            m[rows, rows + k] += t
    return m


def _band_right(in_cols, out_cols, taps):
    m = np.zeros((in_cols, out_cols), np.float32)
    cols = np.arange(out_cols)
    for k, t in enumerate(taps):
        t = float(t)
        if t != 0.0:
            m[cols + k, cols] += t
    return m


def _block_diag(block, n):
    r, c = block.shape
    out = np.zeros((n * r, n * c), block.dtype)
    for i in range(n):
        out[i * r:(i + 1) * r, i * c:(i + 1) * c] = block
    return out


def _round_up(x, m):
    return (x + m - 1) // m * m


@functools.lru_cache(maxsize=None)
def _build_constants(H, W):
    """Build all banded/mixing matrices and pack them into one padded slab.

    Returns (slab, row_offsets) where slab rows are 8-aligned per block and the
    width is 128-aligned, so static in-kernel slices are sublane/lane aligned.
    """
    Hm, Wm = H - 2, W - 2
    Hv, Wv = H - (_SSIM_WIN - 1), W - (_SSIM_WIN - 1)

    # --- combined mixer: [x | y] (H, 6W) @ M (6W, 8W)
    #     output lanes = [Rx | Gx | Bx | Ry | Gy | By | gray_x | gray_y]
    M = np.zeros((6 * W, 8 * W), np.float32)
    for w in range(W):
        for c in range(3):
            M[3 * w + c, c * W + w] = 1.0              # planar channels of x
            M[3 * w + c, 6 * W + w] = _GRAY[c]         # grayscale of x
            M[3 * W + 3 * w + c, 3 * W + c * W + w] = 1.0   # planar channels of y
            M[3 * W + 3 * w + c, 7 * W + w] = _GRAY[c]      # grayscale of y

    # --- Sobel: one stacked vertical pass + one lane-concatenated horizontal pass
    sv = _band_left(Hm, H, (1.0, 2.0, 1.0))            # vertical smoothing
    dv = _band_left(Hm, H, (-1.0, 0.0, 1.0))           # vertical derivative
    SD = np.concatenate([sv, dv], axis=0)              # (2Hm, H)
    dxb = _block_diag(_band_right(W, Wm, (-1.0, 0.0, 1.0)), 2)  # (2W, 2Wm)
    sxb = _block_diag(_band_right(W, Wm, (1.0, 2.0, 1.0)), 2)   # (2W, 2Wm)
    SR = np.concatenate([dxb, sxb], axis=1)            # (2W, 4Wm)

    # --- Gaussian: one left pass + one block-diagonal right pass on [cl | sq | xy]
    GH = _band_left(Hv, H, _GAUSS)                     # (Hv, H)
    GW = _block_diag(_band_right(W, Wv, _GAUSS), 12)   # (12W, 12Wv)

    blocks = [M, SD, SR, GH, GW]
    width = _round_up(max(128, max(b.shape[1] for b in blocks)), 128)
    offs, rows = [], 0
    for b in blocks:
        offs.append(rows)
        rows += _round_up(b.shape[0], 8)
    slab = np.zeros((rows, width), np.float32)
    for o, b in zip(offs, blocks):
        slab[o:o + b.shape[0], :b.shape[1]] = b
    return jnp.asarray(slab), tuple(offs)


# ---------------------------------------------------------------------------
# Pallas kernel (single invocation, everything VMEM resident, 5 matmuls total)
# ---------------------------------------------------------------------------
def _ssim_edge_kernel(img_ref, c_ref, loss_ref, *, H, W, offs, edge_w, ssim_w):
    Hm, Wm = H - 2, W - 2
    Hv, Wv = H - (_SSIM_WIN - 1), W - (_SSIM_WIN - 1)
    o_m, o_sd, o_sr, o_gh, o_gw = offs

    def mm(a, b):
        return jnp.dot(a, b, preferred_element_type=jnp.float32)

    # ---- channel de-interleave + grayscale combine (1 matmul) --------------
    # p lanes: [ Rx | Gx | Bx | Ry | Gy | By | gray_x | gray_y ]   (H, 8W)
    p = mm(img_ref[...], c_ref[o_m:o_m + 6 * W, 0:8 * W])

    # ---- Edge loss: fused separable Sobel (2 matmuls) -----------------------
    g2 = p[:, 6 * W:8 * W]                              # (H, 2W) both grayscales
    t = mm(c_ref[o_sd:o_sd + 2 * Hm, 0:H], g2)          # (2Hm, 2W) [smooth ; deriv]
    u = mm(t, c_ref[o_sr:o_sr + 2 * W, 0:4 * Wm])       # (2Hm, 4Wm)
    grad_x = u[:Hm, :2 * Wm]                            # sobel-x of both grays
    grad_y = u[Hm:, 2 * Wm:]                            # sobel-y of both grays
    mag = jnp.sqrt(grad_x * grad_x + grad_y * grad_y)   # (Hm, 2Wm)
    dmag = mag[:, :Wm] - mag[:, Wm:]                    # output - target magnitude
    edge_loss = jnp.mean(dmag * dmag)

    # ---- SSIM loss: fused separable Gaussian statistics (2 matmuls) ---------
    cl = jnp.clip(p[:, :6 * W], 0.0, 1.0)               # (H, 6W) clamped [xc | yc]
    xc = cl[:, :3 * W]
    yc = cl[:, 3 * W:]
    stats = jnp.concatenate(
        [cl, xc * xc + yc * yc, xc * yc], axis=1)       # (H, 12W)
    f = mm(mm(c_ref[o_gh:o_gh + Hv, 0:H], stats),
           c_ref[o_gw:o_gw + 12 * W, 0:12 * Wv])        # (Hv, 12Wv)

    mu_x = f[:, 0:3 * Wv]
    mu_y = f[:, 3 * Wv:6 * Wv]
    e_sq = f[:, 6 * Wv:9 * Wv]                          # E[x^2] + E[y^2]
    e_xy = f[:, 9 * Wv:12 * Wv]                         # E[x*y]
    mu_x2 = mu_x * mu_x
    mu_y2 = mu_y * mu_y
    mu_xy = mu_x * mu_y
    sigma_sum = e_sq - mu_x2 - mu_y2                    # sigma_xx + sigma_yy
    sigma_xy = e_xy - mu_xy

    c1 = (0.01 * 1.0) ** 2
    c2 = (0.03 * 1.0) ** 2
    num = (2.0 * mu_xy + c1) * (2.0 * sigma_xy + c2)
    den = (mu_x2 + mu_y2 + c1) * (sigma_sum + c2)
    ssim_map = num * pl.reciprocal(den, approx=True)
    ssim_loss = 1.0 - jnp.mean(ssim_map)

    total = edge_w * edge_loss + ssim_w * ssim_loss
    loss_ref[...] = total * jnp.ones((1, 128), jnp.float32)


# ---------------------------------------------------------------------------
# Wrapper
# ---------------------------------------------------------------------------
def _impl(x_hwc, y_hwc, edge_w, ssim_w):
    H, W, _ = x_hwc.shape
    slab, offs = _build_constants(H, W)

    # Free row-major reshape (H, W, 3) -> (H, 3W); lane-concatenate both images
    # into one operand so the kernel does a single mixing matmul and one DMA.
    x2 = x_hwc.astype(jnp.float32).reshape(H, 3 * W)
    y2 = y_hwc.astype(jnp.float32).reshape(H, 3 * W)
    img = jnp.concatenate([x2, y2], axis=1)             # (H, 6W)

    kernel = functools.partial(_ssim_edge_kernel, H=H, W=W, offs=offs,
                               edge_w=float(edge_w), ssim_w=float(ssim_w))
    out = pl.pallas_call(
        kernel,
        out_shape=jax.ShapeDtypeStruct((1, 128), jnp.float32),
        in_specs=[pl.BlockSpec(memory_space=pltpu.MemorySpace.VMEM)] * 2,
        out_specs=pl.BlockSpec(memory_space=pltpu.MemorySpace.VMEM),
    )(img, slab)
    return out[0, 0]


_impl_jit = jax.jit(_impl, static_argnums=(2, 3))


def ssim_and_edge_loss(output_image, target_image,
                       edge_loss_weight=0.05, ssim_loss_weight=0.1):
    """output_image / target_image: (H, W, 3) float32 (HWC, like the PyTorch module)."""
    H, W, C = output_image.shape
    if C != 3:
        raise ValueError("only RGB (H, W, 3) inputs are supported")
    if H < _SSIM_WIN or W < _SSIM_WIN:
        raise ValueError(f"H and W must be >= {_SSIM_WIN} for the 11x11 SSIM window")
    return _impl_jit(output_image, target_image,
                     float(edge_loss_weight), float(ssim_loss_weight))


# ---------------------------------------------------------------------------
# Pure-JAX reference (for self-check)
# ---------------------------------------------------------------------------
def _reference(output_image, target_image, edge_w=0.05, ssim_w=0.1):
    x = jnp.transpose(output_image.astype(jnp.float32), (2, 0, 1))
    y = jnp.transpose(target_image.astype(jnp.float32), (2, 0, 1))
    gx = _GRAY[0] * x[0] + _GRAY[1] * x[1] + _GRAY[2] * x[2]
    gy = _GRAY[0] * y[0] + _GRAY[1] * y[1] + _GRAY[2] * y[2]
    kx = jnp.array(_SOBEL_X, jnp.float32)
    ky = jnp.array(_SOBEL_Y, jnp.float32)

    def conv2(img, k):
        return jax.lax.conv_general_dilated(img[None, None], k[None, None],
                                            (1, 1), "VALID")[0, 0]

    go = jnp.sqrt(conv2(gx, kx) ** 2 + conv2(gx, ky) ** 2)
    gt = jnp.sqrt(conv2(gy, kx) ** 2 + conv2(gy, ky) ** 2)
    edge = jnp.mean((go - gt) ** 2)

    xc = jnp.clip(x, 0, 1)
    yc = jnp.clip(y, 0, 1)
    g1 = jnp.array(_GAUSS, jnp.float32)
    w2 = jnp.outer(g1, g1)

    def gf(img):
        return jax.lax.conv_general_dilated(
            img[:, None], w2[None, None], (1, 1), "VALID")[:, 0]

    mu_x, mu_y = gf(xc), gf(yc)
    sxx = gf(xc * xc) - mu_x ** 2
    syy = gf(yc * yc) - mu_y ** 2
    sxy = gf(xc * yc) - mu_x * mu_y
    c1, c2 = 0.01 ** 2, 0.03 ** 2
    ssim = jnp.mean(((2 * mu_x * mu_y + c1) * (2 * sxy + c2)) /
                    ((mu_x ** 2 + mu_y ** 2 + c1) * (sxx + syy + c2)))
    return edge_w * edge + ssim_w * (1.0 - ssim)


if __name__ == "__main__":
    key = jax.random.PRNGKey(0)
    k1, k2 = jax.random.split(key)
    H, W, C = 16, 16, 3
    output_image = jax.random.uniform(k1, (H, W, C), jnp.float32)
    target_image = jax.random.uniform(k2, (H, W, C), jnp.float32)

    loss = jax.block_until_ready(ssim_and_edge_loss(output_image, target_image))
    ref = jax.block_until_ready(_reference(output_image, target_image))

    # Tolerance accommodates MXU f32 multi-pass rounding + approx reciprocal vs.
    # the XLA conv reference.
    l, r = float(loss), float(ref)
    assert abs(l - r) < 1e-3 + 5e-3 * abs(r), (l, r)
    print("KERNEL_OK")
</pallas_src>

<mosaic_0001>
module attributes {stable_mosaic.version = 11 : i64} {
  func.func @_ssim_edge_kernel(%arg0: memref<16x96xf32, #tpu.memory_space<vmem>>, %arg1: memref<360x128xf32, #tpu.memory_space<vmem>>, %arg2: memref<1x128xf32, #tpu.memory_space<vmem>>) attributes {dimension_semantics = [], scalar_prefetch = 0 : i64, scratch_operands = 0 : i64, tpu.core_type = #tpu.core_type<tc>} {
    %c0 = arith.constant 0 : index
    %c0_0 = arith.constant 0 : index
    %0 = vector.load %arg0[%c0, %c0_0] : memref<16x96xf32, #tpu.memory_space<vmem>>, vector<16x96xf32>
    %c0_1 = arith.constant 0 : index
    %c0_2 = arith.constant 0 : index
    %1 = vector.load %arg1[%c0_1, %c0_2] : memref<360x128xf32, #tpu.memory_space<vmem>>, vector<96x128xf32>
    %cst = arith.constant dense<0.000000e+00> : vector<16x128xf32>
    %2 = tpu.matmul %0, %1, %cst {dimension_numbers = #tpu.dot_dimension_numbers<[1], [0], [0], [1], [0, 0, 1, 1], [], []>} : vector<16x96xf32>, vector<96x128xf32>, vector<16x128xf32> -> vector<16x128xf32>
    %3 = vector.extract_strided_slice %2 {offsets = [0, 96], sizes = [16, 32], strides = [1, 1]} : vector<16x128xf32> to vector<16x32xf32>
    %c96 = arith.constant 96 : index
    %c0_3 = arith.constant 0 : index
    %4 = vector.load %arg1[%c96, %c0_3] : memref<360x128xf32, #tpu.memory_space<vmem>>, vector<28x16xf32>
    %cst_4 = arith.constant dense<0.000000e+00> : vector<28x32xf32>
    %5 = tpu.matmul %4, %3, %cst_4 {dimension_numbers = #tpu.dot_dimension_numbers<[1], [0], [0], [1], [0, 0, 1, 1], [], []>} : vector<28x16xf32>, vector<16x32xf32>, vector<28x32xf32> -> vector<28x32xf32>
    %c128 = arith.constant 128 : index
    %c0_5 = arith.constant 0 : index
    %6 = vector.load %arg1[%c128, %c0_5] : memref<360x128xf32, #tpu.memory_space<vmem>>, vector<32x56xf32>
    %cst_6 = arith.constant dense<0.000000e+00> : vector<28x56xf32>
    %7 = tpu.matmul %5, %6, %cst_6 {dimension_numbers = #tpu.dot_dimension_numbers<[1], [0], [0], [1], [0, 0, 1, 1], [], []>} : vector<28x32xf32>, vector<32x56xf32>, vector<28x56xf32> -> vector<28x56xf32>
    %8 = vector.extract_strided_slice %7 {offsets = [0, 0], sizes = [14, 28], strides = [1, 1]} : vector<28x56xf32> to vector<14x28xf32>
    %9 = vector.extract_strided_slice %7 {offsets = [14, 28], sizes = [14, 28], strides = [1, 1]} : vector<28x56xf32> to vector<14x28xf32>
    %10 = arith.mulf %8, %8 : vector<14x28xf32>
    %11 = arith.mulf %9, %9 : vector<14x28xf32>
    %12 = arith.addf %10, %11 : vector<14x28xf32>
    %13 = math.sqrt %12 : vector<14x28xf32>
    %14 = vector.extract_strided_slice %13 {offsets = [0, 0], sizes = [14, 14], strides = [1, 1]} : vector<14x28xf32> to vector<14x14xf32>
    %15 = vector.extract_strided_slice %13 {offsets = [0, 14], sizes = [14, 14], strides = [1, 1]} : vector<14x28xf32> to vector<14x14xf32>
    %16 = arith.subf %14, %15 : vector<14x14xf32>
    %17 = arith.mulf %16, %16 : vector<14x14xf32>
    %18 = vector.shape_cast %17 : vector<14x14xf32> to vector<1x14x14xf32>
    %cst_7 = arith.constant dense<0.000000e+00> : vector<1xf32>
    %19 = vector.multi_reduction <add>, %18, %cst_7 [1, 2] : vector<1x14x14xf32> to vector<1xf32>
    %20 = vector.shape_cast %19 : vector<1xf32> to vector<1x1x1xf32>
    %21 = vector.extract %20[0, 0, 0] : f32 from vector<1x1x1xf32>
    %cst_8 = arith.constant 1.960000e+02 : f32
    %22 = arith.divf %21, %cst_8 : f32
    %23 = vector.extract_strided_slice %2 {offsets = [0, 0], sizes = [16, 96], strides = [1, 1]} : vector<16x128xf32> to vector<16x96xf32>
    %cst_9 = arith.constant 0.000000e+00 : f32
    %cst_10 = arith.constant 1.000000e+00 : f32
    %24 = vector.broadcast %cst_9 : f32 to vector<16x96xf32>
    %25 = arith.maximumf %24, %23 : vector<16x96xf32>
    %26 = vector.broadcast %cst_10 : f32 to vector<16x96xf32>
    %27 = arith.minimumf %26, %25 : vector<16x96xf32>
    %28 = vector.extract_strided_slice %27 {offsets = [0, 0], sizes = [16, 48], strides = [1, 1]} : vector<16x96xf32> to vector<16x48xf32>
    %29 = vector.extract_strided_slice %27 {offsets = [0, 48], sizes = [16, 48], strides = [1, 1]} : vector<16x96xf32> to vector<16x48xf32>
    %30 = arith.mulf %28, %28 : vector<16x48xf32>
    %31 = arith.mulf %29, %29 : vector<16x48xf32>
    %32 = arith.addf %30, %31 : vector<16x48xf32>
    %33 = arith.mulf %28, %29 : vector<16x48xf32>
    %34 = tpu.concatenate %27, %32, %33 in 1 : vector<16x96xf32>, vector<16x48xf32>, vector<16x48xf32> -> vector<16x192xf32>
    %c160 = arith.constant 160 : index
    %c0_11 = arith.constant 0 : index
    %35 = vector.load %arg1[%c160, %c0_11] : memref<360x128xf32, #tpu.memory_space<vmem>>, vector<6x16xf32>
    %cst_12 = arith.constant dense<0.000000e+00> : vector<6x192xf32>
    %36 = tpu.matmul %35, %34, %cst_12 {dimension_numbers = #tpu.dot_dimension_numbers<[1], [0], [0], [1], [0, 0, 1, 1], [], []>} : vector<6x16xf32>, vector<16x192xf32>, vector<6x192xf32> -> vector<6x192xf32>
    %c168 = arith.constant 168 : index
    %c0_13 = arith.constant 0 : index
    %37 = vector.load %arg1[%c168, %c0_13] : memref<360x128xf32, #tpu.memory_space<vmem>>, vector<192x72xf32>
    %cst_14 = arith.constant dense<0.000000e+00> : vector<6x72xf32>
    %38 = tpu.matmul %36, %37, %cst_14 {dimension_numbers = #tpu.dot_dimension_numbers<[1], [0], [0], [1], [0, 0, 1, 1], [], []>} : vector<6x192xf32>, vector<192x72xf32>, vector<6x72xf32> -> vector<6x72xf32>
    %39 = vector.extract_strided_slice %38 {offsets = [0, 0], sizes = [6, 18], strides = [1, 1]} : vector<6x72xf32> to vector<6x18xf32>
    %40 = vector.extract_strided_slice %38 {offsets = [0, 18], sizes = [6, 18], strides = [1, 1]} : vector<6x72xf32> to vector<6x18xf32>
    %41 = vector.extract_strided_slice %38 {offsets = [0, 36], sizes = [6, 18], strides = [1, 1]} : vector<6x72xf32> to vector<6x18xf32>
    %42 = vector.extract_strided_slice %38 {offsets = [0, 54], sizes = [6, 18], strides = [1, 1]} : vector<6x72xf32> to vector<6x18xf32>
    %43 = arith.mulf %39, %39 : vector<6x18xf32>
    %44 = arith.mulf %40, %40 : vector<6x18xf32>
    %45 = arith.mulf %39, %40 : vector<6x18xf32>
    %46 = arith.subf %41, %43 : vector<6x18xf32>
    %47 = arith.subf %46, %44 : vector<6x18xf32>
    %48 = arith.subf %42, %45 : vector<6x18xf32>
    %cst_15 = arith.constant 2.000000e+00 : f32
    %49 = vector.broadcast %cst_15 : f32 to vector<6x18xf32>
    %50 = arith.mulf %49, %45 : vector<6x18xf32>
    %cst_16 = arith.constant 9.99999974E-5 : f32
    %51 = vector.broadcast %cst_16 : f32 to vector<6x18xf32>
    %52 = arith.addf %50, %51 : vector<6x18xf32>
    %cst_17 = arith.constant 2.000000e+00 : f32
    %53 = vector.broadcast %cst_17 : f32 to vector<6x18xf32>
    %54 = arith.mulf %53, %48 : vector<6x18xf32>
    %cst_18 = arith.constant 8.99999984E-4 : f32
    %55 = vector.broadcast %cst_18 : f32 to vector<6x18xf32>
    %56 = arith.addf %54, %55 : vector<6x18xf32>
    %57 = arith.mulf %52, %56 : vector<6x18xf32>
    %58 = arith.addf %43, %44 : vector<6x18xf32>
    %cst_19 = arith.constant 9.99999974E-5 : f32
    %59 = vector.broadcast %cst_19 : f32 to vector<6x18xf32>
    %60 = arith.addf %58, %59 : vector<6x18xf32>
    %cst_20 = arith.constant 8.99999984E-4 : f32
    %61 = vector.broadcast %cst_20 : f32 to vector<6x18xf32>
    %62 = arith.addf %47, %61 : vector<6x18xf32>
    %63 = arith.mulf %60, %62 : vector<6x18xf32>
    %64 = tpu.reciprocal %63 {approx = true} : vector<6x18xf32> -> vector<6x18xf32>
    %65 = arith.mulf %57, %64 : vector<6x18xf32>
    %66 = vector.shape_cast %65 : vector<6x18xf32> to vector<1x6x18xf32>
    %cst_21 = arith.constant dense<0.000000e+00> : vector<1xf32>
    %67 = vector.multi_reduction <add>, %66, %cst_21 [1, 2] : vector<1x6x18xf32> to vector<1xf32>
    %68 = vector.shape_cast %67 : vector<1xf32> to vector<1x1x1xf32>
    %69 = vector.extract %68[0, 0, 0] : f32 from vector<1x1x1xf32>
    %cst_22 = arith.constant 1.080000e+02 : f32
    %70 = arith.divf %69, %cst_22 : f32
    %cst_23 = arith.constant 1.000000e+00 : f32
    %71 = arith.subf %cst_23, %70 : f32
    %cst_24 = arith.constant 5.000000e-02 : f32
    %72 = arith.mulf %cst_24, %22 : f32
    %cst_25 = arith.constant 1.000000e-01 : f32
    %73 = arith.mulf %cst_25, %71 : f32
    %74 = arith.addf %72, %73 : f32
    %cst_26 = arith.constant 1.000000e+00 : f32
    %75 = vector.broadcast %cst_26 : f32 to vector<1x128xf32>
    %76 = vector.broadcast %74 : f32 to vector<1x128xf32>
    %77 = arith.mulf %76, %75 : vector<1x128xf32>
    %c0_27 = arith.constant 0 : index
    %c0_28 = arith.constant 0 : index
    %78 = vector.load %arg2[%c0_27, %c0_28] : memref<1x128xf32, #tpu.memory_space<vmem>>, vector<1x128xf32>
    tpu.vector_store %arg2[%c0_27, %c0_28], %77 {strides = array<i32>} : memref<1x128xf32, #tpu.memory_space<vmem>>, vector<1x128xf32>,
    return
  }
}

</mosaic_0001>

<llo_original>
// kernel: _impl.1
$region0: #{_impl.1}
  #allocation0 [shape = 'u32[]', space=smem, size = 0x4, offset = 0x4, fixed_abs, tag = 'smem constant byte address 0x4 - core index']
  #allocation1 [shape = 'u32[72,128]{1,0:T(1,128)}', space=vmem, size = 0x9000, scoped, tag = 'internal scratch']
  %s0 = inlined_call_operand.vmem [shape: f32[16,96], index: 0, kind: input, shape index: {}]
  %s1 = inlined_call_operand.hbm [shape: f32[360,128], index: 1, kind: input, shape index: {}]
  %s2 = inlined_call_operand.hbm [shape: f32[1,128], index: 2, kind: output, shape index: {}]
  %s3 = sld [smem:[#allocation0]]
  $region22: #{_impl.1} parent=0
    _
  %s5 = ssub.s32 1, %s3
  %s6 = scalar_select 0, %s5, %s3
  $region1: #{_impl.1} parent=0
    #allocation2 [shape = 'u8[184320]{0}', space=vmem, size = 0x2d000, scoped, tag = 'input window, operand 1, single buffered']
    #allocation3 [shape = 's32[1]{0}', space=sflag, size = 0x4, scoped, tag = 'scoped memory for _impl.1']
    #allocation4 [shape = 's32[1]{0}', space=sflag, size = 0x4, scoped, tag = 'scoped memory for _impl.1']
    #allocation5 [shape = 'u8[512]{0}', space=vmem, size = 0x400, scoped, tag = 'output window, operand 0, single buffered']
    %7 = vsyncpa [#allocation3], 0
    %8 = vsyncpa [#allocation4], 0
    // Predicated region
    $region2: #{_impl.1} parent=1 // pred_check
      _
    $region3: #{_impl.1} parent=1 // pred_check_branch
      %10 = sbr.rel (0) target = $region5
    $region4: #{_impl.1} parent=1 // pred_region
      _
    $region5: #{_impl.1} parent=1 // pred_fallthru
      _
    // Predicated region
    $region6: #{_impl.1} parent=1 // pred_check
      _
    $region7: #{_impl.1} parent=1 // pred_check_branch
      %12 = sbr.rel (0) target = $region9
    $region8: #{_impl.1} parent=1 // pred_region
      %14 = vsyncadd [#allocation3], 0
      %s15 = sshll.u32 %s1, 4
      %s16 = int_to_ptr.hbm [resolvable:$true] %s15
      %s17 = sshll.u32 [#allocation2], 4
      %s18 = int_to_ptr.vmem [resolvable:$true] %s17
      %23 = dma.hbm_to_vmem [thread:$0]  %s16, 5760, %s18, [#allocation3], 128, 128, 8
    $region9: #{_impl.1} parent=1 // pred_fallthru
      _
    // Predicated region
    $region10: #{_impl.1} parent=1 // pred_check
      _
    $region11: #{_impl.1} parent=1 // pred_check_branch
      %25 = sbr.rel (0) target = $region13
    $region12: #{_impl.1} parent=1 // pred_region
      %27 = dma.done [#allocation3], 5760
    $region13: #{_impl.1} parent=1 // pred_fallthru
      _
    %v28 = vld [vmem:[%s0] sm:$0xff]
    %v29 = vld [vmem:[%s0 + $0x8] sm:$0xff]
    %v30 = vld [vmem:[#allocation2] sm:$0xff]
    %v31 = vld [vmem:[#allocation2 + $0x8] sm:$0xff]
    %v32 = vld [vmem:[#allocation2 + $0x10] sm:$0xff]
    %v33 = vld [vmem:[#allocation2 + $0x18] sm:$0xff]
    %v34 = vld [vmem:[#allocation2 + $0x20] sm:$0xff]
    %v35 = vld [vmem:[#allocation2 + $0x28] sm:$0xff]
    %v36 = vld [vmem:[#allocation2 + $0x30] sm:$0xff]
    %v37 = vld [vmem:[#allocation2 + $0x38] sm:$0xff]
    %v38 = vld [vmem:[#allocation2 + $0x40] sm:$0xff]
    %v39 = vld [vmem:[#allocation2 + $0x48] sm:$0xff]
    %v40 = vld [vmem:[#allocation2 + $0x50] sm:$0xff]
    %v41 = vld [vmem:[#allocation2 + $0x58] sm:$0xff]
    %vm42 = vcmask 785408
    %v44 = vsel %vm42, %v28, 0
    %v47 = vsel %vm42, %v29, 0
    %49 = vmatpush.msra.mxu0 0.0
    %50 = vmatpush.msra.mxu0 0.0
    %51 = vmatpush.msra.mxu0 0.0
    %52 = vmatpush.msra.mxu0 0.0
    %53 = vmatpush.msra.mxu0 %v41
    %54 = vmatpush.msra.mxu0 %v40
    %55 = vmatpush.msra.mxu0 %v39
    %56 = vmatpush.msra.mxu0 %v38
    %57 = vmatpush.msra.mxu0 %v37
    %58 = vmatpush.msra.mxu0 %v36
    %59 = vmatpush.msra.mxu0 %v35
    %60 = vmatpush.msra.mxu0 %v34
    %61 = vmatpush.msra.mxu0 %v33
    %62 = vmatpush.msra.mxu0 %v32
    %63 = vmatpush.msra.mxu0 %v31
    %64 = vmatpush.msra.mxu0 %v30
    %65 = vmatmul.f32.gmra.mxu0 %v44
    %v66 = vpop.f32.mrf.mxu0
    %v67 = vadd.f32 0.0, %v66
    %68 = vmatmul.f32.gmra.mxu0 %v47
    %v69 = vpop.f32.mrf.mxu0
    %v70 = vadd.f32 0.0, %v69
    %71 = vdwg.mxu0
    %v72 = vld [vmem:[#allocation2 + $0x60] sm:$0xff]
    %v73 = vld [vmem:[#allocation2 + $0x68] sm:$0xff]
    %v74 = vld [vmem:[#allocation2 + $0x70] sm:$0xff]
    %v75 = vld [vmem:[#allocation2 + $0x78] sm:$0xf]
    %78 = vrot.lane.b32.xlu0 %v67, 32
    %v79 = vpop.permute.xlu0 %78
    %80 = vrot.lane.b32.xlu0 %v70, 32
    %v81 = vpop.permute.xlu0 %80
    %vm84 = vcmask 130048
    %v86 = vsel %vm84, %v72, 0
    %v89 = vsel %vm84, %v73, 0
    %v92 = vsel %vm84, %v74, 0
    %v95 = vsel %vm84, %v75, 0
    %97 = vmatpush.msra.mxu0 0.0
    %98 = vmatpush.msra.mxu0 0.0
    %99 = vmatpush.msra.mxu0 0.0
    %100 = vmatpush.msra.mxu0 0.0
    %101 = vmatpush.msra.mxu0 0.0
    %102 = vmatpush.msra.mxu0 0.0
    %103 = vmatpush.msra.mxu0 0.0
    %104 = vmatpush.msra.mxu0 0.0
    %105 = vmatpush.msra.mxu0 0.0
    %106 = vmatpush.msra.mxu0 0.0
    %107 = vmatpush.msra.mxu0 0.0
    %108 = vmatpush.msra.mxu0 0.0
    %109 = vmatpush.msra.mxu0 0.0
    %110 = vmatpush.msra.mxu0 0.0
    %111 = vmatpush.msra.mxu0 %v81
    %112 = vmatpush.msra.mxu0 %v79
    %113 = vmatmul.f32.gmra.mxu0 %v86
    %v114 = vpop.f32.mrf.mxu0
    %v115 = vadd.f32 0.0, %v114
    %116 = vmatmul.f32.gmra.mxu0 %v89
    %v117 = vpop.f32.mrf.mxu0
    %v118 = vadd.f32 0.0, %v117
    %119 = vmatmul.f32.gmra.mxu0 %v92
    %v120 = vpop.f32.mrf.mxu0
    %v121 = vadd.f32 0.0, %v120
    %122 = vmatmul.f32.gmra.mxu0 %v95
    %v123 = vpop.f32.mrf.mxu0
    %v124 = vadd.f32 0.0, %v123
    %125 = vdwg.mxu0
    %v126 = vld [vmem:[#allocation2 + $0x80] sm:$0xff]
    %v127 = vld [vmem:[#allocation2 + $0x88] sm:$0xff]
    %v128 = vld [vmem:[#allocation2 + $0x90] sm:$0xff]
    %v129 = vld [vmem:[#allocation2 + $0x98] sm:$0xff]
    %vm130 = vcmask 261120
    %v132 = vsel %vm130, %v115, 0
    %v135 = vsel %vm130, %v118, 0
    %v138 = vsel %vm130, %v121, 0
    %v141 = vsel %vm130, %v124, 0
    %143 = vmatpush.msra.mxu0 0.0
    %144 = vmatpush.msra.mxu0 0.0
    %145 = vmatpush.msra.mxu0 0.0
    %146 = vmatpush.msra.mxu0 0.0
    %147 = vmatpush.msra.mxu0 0.0
    %148 = vmatpush.msra.mxu0 0.0
    %149 = vmatpush.msra.mxu0 0.0
    %150 = vmatpush.msra.mxu0 0.0
    %151 = vmatpush.msra.mxu0 0.0
    %152 = vmatpush.msra.mxu0 0.0
    %153 = vmatpush.msra.mxu0 0.0
    %154 = vmatpush.msra.mxu0 0.0
    %155 = vmatpush.msra.mxu0 %v129
    %156 = vmatpush.msra.mxu0 %v128
    %157 = vmatpush.msra.mxu0 %v127
    %158 = vmatpush.msra.mxu0 %v126
    %159 = vmatmul.f32.gmra.mxu0 %v132
    %v160 = vpop.f32.mrf.mxu0
    %v161 = vadd.f32 0.0, %v160
    %162 = vmatmul.f32.gmra.mxu0 %v135
    %v163 = vpop.f32.mrf.mxu0
    %v164 = vadd.f32 0.0, %v163
    %165 = vmatmul.f32.gmra.mxu0 %v138
    %v166 = vpop.f32.mrf.mxu0
    %v167 = vadd.f32 0.0, %v166
    %168 = vmatmul.f32.gmra.mxu0 %v141
    %v169 = vpop.f32.mrf.mxu0
    %v170 = vadd.f32 0.0, %v169
    %171 = vdwg.mxu0
    %v172 = vmul.f32 %v161, %v161
    %v173 = vmul.f32 %v164, %v164
    %v174 = vmul.f32 %v167, %v167
    %v175 = vmul.f32 %v170, %v170
    %vm179 = vcmask 1041408
    %v180 = vrot.slane %v173, 6
    %v181 = vrot.slane %v174, 6
    %v182 = vsel %vm179, %v180, %v181
    %v183 = vrot.slane %v175, 6
    %v184 = vsel %vm179, %v181, %v183
    %185 = vrot.lane.b32.xlu0 %v182, 100
    %v186 = vpop.permute.xlu0 %185
    %187 = vrot.lane.b32.xlu0 %v184, 100
    %v188 = vpop.permute.xlu0 %187
    %v191 = vadd.f32 %v172, %v186
    %v192 = vadd.f32 %v173, %v188
    %v193 = vrsqrt.pop %v191
    %v194 = vmul.f32 %v193, %v191
    %v195 = vmul.f32 %v194, %v193
    %v196 = vmul.f32 0.5, %v195
    %v197 = vsub.f32 1.5, %v196
    %v198 = vmul.f32 %v193, %v197
    %v199 = vmul.f32 %v191, %v198
    %vm200 = vcmp.eq.f32.partialorder %v191, inf
    %v201 = vsel %vm200, %v191, %v199
    %vm202 = vcmp.eq.f32.partialorder %v191, 0.0
    %v203 = vand.u32 %v191, 2147483648
    %v204 = vsel %vm202, %v203, %v201
    %v205 = vrsqrt.pop %v192
    %v206 = vmul.f32 %v205, %v192
    %v207 = vmul.f32 %v206, %v205
    %v208 = vmul.f32 0.5, %v207
    %v209 = vsub.f32 1.5, %v208
    %v210 = vmul.f32 %v205, %v209
    %v211 = vmul.f32 %v192, %v210
    %vm212 = vcmp.eq.f32.partialorder %v192, inf
    %v213 = vsel %vm212, %v192, %v211
    %vm214 = vcmp.eq.f32.partialorder %v192, 0.0
    %v215 = vand.u32 %v192, 2147483648
    %v216 = vsel %vm214, %v215, %v213
    %219 = vrot.lane.b32.xlu0 %v204, 114
    %v220 = vpop.permute.xlu0 %219
    %221 = vrot.lane.b32.xlu0 %v216, 114
    %v222 = vpop.permute.xlu0 %221
    %v225 = vsub.f32 %v204, %v220
    %v226 = vsub.f32 %v216, %v222
    %v227 = vmul.f32 %v225, %v225
    %v228 = vmul.f32 %v226, %v226
    %vm229 = vcmask 113664
    %v230 = vsel %vm229, %v227, 0.0
    %vm231 = vcmask 111616
    %v232 = vsel %vm231, %v228, 0.0
    %v233 = vadd.f32 %v230, %v232
    %234 = vadd.xlane.f32.xlu0 %v233
    %v235 = vpop.xlane.xlu0 %234
    %v236 = vrot.slane %v235, 4
    %v237 = vadd.f32 %v235, %v236
    %v238 = vrot.slane %v237, 2
    %v239 = vadd.f32 %v237, %v238
    %v240 = vrot.slane %v239, 1
    %v241 = vadd.f32 %v239, %v240
    %s242 = vtos %v241
    %v243 = vrcp.pop 196.0
    %v244 = vmul.f32 196.0, %v243
    %v245 = vsub.f32 1.0, %v244
    %v246 = vmul.f32 %v243, %v245
    %v247 = vadd.f32 %v243, %v246
    %vm248 = vweird.f32 %v243
    %v249 = vsel %vm248, %v243, %v247
    %s250 = vtos %v249
    %s251 = smul.f32 %s242, %s250
    %v252 = vmax.f32 %v67, 0.0
    %v253 = vmax.f32 %v70, 0.0
    %v254 = vmin.f32 %v252, 1.0
    %v255 = vmin.f32 %v253, 1.0
    %v256 = vmul.f32 %v254, %v254
    %v257 = vmul.f32 %v255, %v255
    %260 = vrot.lane.b32.xlu0 %v256, 80
    %v261 = vpop.permute.xlu0 %260
    %262 = vrot.lane.b32.xlu0 %v257, 80
    %v263 = vpop.permute.xlu0 %262
    %v266 = vadd.f32 %v256, %v261
    %v267 = vadd.f32 %v257, %v263
    %270 = vrot.lane.b32.xlu0 %v254, 80
    %v271 = vpop.permute.xlu0 %270
    %272 = vrot.lane.b32.xlu0 %v255, 80
    %v273 = vpop.permute.xlu0 %272
    %v276 = vmul.f32 %v254, %v271
    %v277 = vmul.f32 %v255, %v273
    %280 = vrot.lane.b32.xlu0 %v266, 96
    %v281 = vpop.permute.xlu0 %280
    %282 = vrot.lane.b32.xlu0 %v267, 96
    %v283 = vpop.permute.xlu0 %282
    %288 = vrot.lane.b32.xlu0 %v276, 16
    %v289 = vpop.permute.xlu0 %288
    %290 = vrot.lane.b32.xlu0 %v277, 16
    %v291 = vpop.permute.xlu0 %290
    %v294 = vsel %vm42, %v254, %v281
    %v295 = vsel %vm42, %v255, %v283
    %v296 = vsel %vm84, %v281, %v289
    %v297 = vsel %vm84, %v283, %v291
    %v298 = vld [vmem:[#allocation2 + $0xa0] sm:$0x3f]
    %v300 = vsel %vm84, %v298, 0
    %302 = vmatpush.msra.mxu0 0.0
    %303 = vmatpush.msra.mxu0 0.0
    %304 = vmatpush.msra.mxu0 0.0
    %305 = vmatpush.msra.mxu0 0.0
    %306 = vmatpush.msra.mxu0 0.0
    %307 = vmatpush.msra.mxu0 0.0
    %308 = vmatpush.msra.mxu0 0.0
    %309 = vmatpush.msra.mxu0 0.0
    %310 = vmatpush.msra.mxu0 0.0
    %311 = vmatpush.msra.mxu0 0.0
    %312 = vmatpush.msra.mxu0 0.0
    %313 = vmatpush.msra.mxu0 0.0
    %314 = vmatpush.msra.mxu0 0.0
    %315 = vmatpush.msra.mxu0 0.0
    %316 = vmatpush.msra.mxu0 %v295
    %317 = vmatpush.msra.mxu0 %v294
    %318 = vmatmul.f32.gmra.mxu0 %v300
    %v319 = vpop.f32.mrf.mxu0
    %v320 = vadd.f32 0.0, %v319
    %321 = vdwg.mxu0
    %322 = vmatpush.msra.mxu0 0.0
    %323 = vmatpush.msra.mxu0 0.0
    %324 = vmatpush.msra.mxu0 0.0
    %325 = vmatpush.msra.mxu0 0.0
    %326 = vmatpush.msra.mxu0 0.0
    %327 = vmatpush.msra.mxu0 0.0
    %328 = vmatpush.msra.mxu0 0.0
    %329 = vmatpush.msra.mxu0 0.0
    %330 = vmatpush.msra.mxu0 0.0
    %331 = vmatpush.msra.mxu0 0.0
    %332 = vmatpush.msra.mxu0 0.0
    %333 = vmatpush.msra.mxu0 0.0
    %334 = vmatpush.msra.mxu0 0.0
    %335 = vmatpush.msra.mxu0 0.0
    %336 = vmatpush.msra.mxu0 %v297
    %337 = vmatpush.msra.mxu0 %v296
    %338 = vmatmul.f32.gmra.mxu0 %v300
    %v339 = vpop.f32.mrf.mxu0
    %v340 = vadd.f32 0.0, %v339
    %341 = vdwg.mxu0
    %v342 = vld [vmem:[#allocation2 + $0xa8] sm:$0xff]
    %v343 = vld [vmem:[#allocation2 + $0xb0] sm:$0xff]
    %v344 = vld [vmem:[#allocation2 + $0xb8] sm:$0xff]
    %v345 = vld [vmem:[#allocation2 + $0xc0] sm:$0xff]
    %v346 = vld [vmem:[#allocation2 + $0xc8] sm:$0xff]
    %v347 = vld [vmem:[#allocation2 + $0xd0] sm:$0xff]
    %v348 = vld [vmem:[#allocation2 + $0xd8] sm:$0xff]
    %v349 = vld [vmem:[#allocation2 + $0xe0] sm:$0xff]
    %v350 = vld [vmem:[#allocation2 + $0xe8] sm:$0xff]
    %v351 = vld [vmem:[#allocation2 + $0xf0] sm:$0xff]
    %v352 = vld [vmem:[#allocation2 + $0xf8] sm:$0xff]
    %v353 = vld [vmem:[#allocation2 + $0x100] sm:$0xff]
    %v354 = vld [vmem:[#allocation2 + $0x108] sm:$0xff]
    %v355 = vld [vmem:[#allocation2 + $0x110] sm:$0xff]
    %v356 = vld [vmem:[#allocation2 + $0x118] sm:$0xff]
    %v357 = vld [vmem:[#allocation2 + $0x120] sm:$0xff]
    %v358 = vld [vmem:[#allocation2 + $0x128] sm:$0xff]
    %v359 = vld [vmem:[#allocation2 + $0x130] sm:$0xff]
    %v360 = vld [vmem:[#allocation2 + $0x138] sm:$0xff]
    %v361 = vld [vmem:[#allocation2 + $0x140] sm:$0xff]
    %v362 = vld [vmem:[#allocation2 + $0x148] sm:$0xff]
    %v363 = vld [vmem:[#allocation2 + $0x150] sm:$0xff]
    %v364 = vld [vmem:[#allocation2 + $0x158] sm:$0xff]
    %v365 = vld [vmem:[#allocation2 + $0x160] sm:$0xff]
    %vm366 = vcmask 523264
    %v368 = vsel %vm366, %v340, 0
    %370 = vmatpush.msra.mxu0 %v357
    %371 = vmatpush.msra.mxu0 %v356
    %372 = vmatpush.msra.mxu0 %v355
    %373 = vmatpush.msra.mxu0 %v354
    %374 = vmatpush.msra.mxu0 %v353
    %375 = vmatpush.msra.mxu0 %v352
    %376 = vmatpush.msra.mxu0 %v351
    %377 = vmatpush.msra.mxu0 %v350
    %378 = vmatpush.msra.mxu0 %v349
    %379 = vmatpush.msra.mxu0 %v348
    %380 = vmatpush.msra.mxu0 %v347
    %381 = vmatpush.msra.mxu0 %v346
    %382 = vmatpush.msra.mxu0 %v345
    %383 = vmatpush.msra.mxu0 %v344
    %384 = vmatpush.msra.mxu0 %v343
    %385 = vmatpush.msra.mxu0 %v342
    %386 = vmatmul.f32.gmra.mxu0 %v320
    %v387 = vpop.f32.mrf.mxu0
    %v388 = vadd.f32 0.0, %v387
    %389 = vdwg.mxu0
    %390 = vmatpush.msra.mxu0 0.0
    %391 = vmatpush.msra.mxu0 0.0
    %392 = vmatpush.msra.mxu0 0.0
    %393 = vmatpush.msra.mxu0 0.0
    %394 = vmatpush.msra.mxu0 0.0
    %395 = vmatpush.msra.mxu0 0.0
    %396 = vmatpush.msra.mxu0 0.0
    %397 = vmatpush.msra.mxu0 0.0
    %398 = vmatpush.msra.mxu0 %v365
    %399 = vmatpush.msra.mxu0 %v364
    %400 = vmatpush.msra.mxu0 %v363
    %401 = vmatpush.msra.mxu0 %v362
    %402 = vmatpush.msra.mxu0 %v361
    %403 = vmatpush.msra.mxu0 %v360
    %404 = vmatpush.msra.mxu0 %v359
    %405 = vmatpush.msra.mxu0 %v358
    %406 = vmatmul.f32.gmra.mxu0 %v368
    %v407 = vpop.f32.mrf.mxu0
    %v408 = vadd.f32 %v388, %v407
    %409 = vdwg.mxu0
    %v410 = vmul.f32 %v408, %v408
    %412 = vrot.lane.b32.xlu0 %v408, 110
    %v413 = vpop.permute.xlu0 %412
    %v415 = vmul.f32 %v408, %v413
    %417 = vrot.lane.b32.xlu0 %v410, 36
    %v418 = vpop.permute.xlu0 %417
    %v420 = vsub.f32 %v408, %v418
    %421 = vrot.lane.b32.xlu0 %v410, 18
    %v422 = vpop.permute.xlu0 %421
    %v424 = vsub.f32 %v420, %v422
    %426 = vrot.lane.b32.xlu0 %v415, 54
    %v427 = vpop.permute.xlu0 %426
    %v429 = vsub.f32 %v408, %v427
    %v430 = vmul.f32 %v415, 2.0
    %v431 = vadd.f32 %v430, 0.0001
    %v432 = vmul.f32 %v429, 2.0
    %v433 = vadd.f32 %v432, 0.0009
    %435 = vrot.lane.b32.xlu0 %v433, 74
    %v436 = vpop.permute.xlu0 %435
    %v438 = vmul.f32 %v431, %v436
    %439 = vrot.lane.b32.xlu0 %v410, 110
    %v440 = vpop.permute.xlu0 %439
    %v442 = vadd.f32 %v410, %v440
    %v443 = vadd.f32 %v442, 0.0001
    %v444 = vadd.f32 %v424, 0.0009
    %446 = vrot.lane.b32.xlu0 %v444, 92
    %v447 = vpop.permute.xlu0 %446
    %v449 = vmul.f32 %v443, %v447
    %v450 = vrcp.pop %v449
    %v451 = vmul.f32 %v438, %v450
    %vm452 = vcmask 144384
    %v453 = vsel %vm452, %v451, 0.0
    %454 = vadd.xlane.f32.xlu0 %v453
    %v455 = vpop.xlane.xlu0 %454
    %v456 = vrot.slane %v455, 4
    %v457 = vadd.f32 %v455, %v456
    %v458 = vrot.slane %v457, 2
    %v459 = vadd.f32 %v457, %v458
    %v460 = vrot.slane %v459, 1
    %v461 = vadd.f32 %v459, %v460
    %s462 = vtos %v461
    %v463 = vrcp.pop 108.0
    %v464 = vmul.f32 108.0, %v463
    %v465 = vsub.f32 1.0, %v464
    %v466 = vmul.f32 %v463, %v465
    %v467 = vadd.f32 %v463, %v466
    %vm468 = vweird.f32 %v463
    %v469 = vsel %vm468, %v463, %v467
    %s470 = vtos %v469
    %s471 = smul.f32 %s462, %s470
    %s472 = ssub.f32 1.0, %s471
    %s473 = smul.f32 %s251, 0.05
    %s474 = smul.f32 %s472, 0.1
    %s475 = sadd.f32 %s473, %s474
    %v476 = vstv %s475
    %477 = vst [vmem:[#allocation5] sm:$0x1] %v476
    // Predicated region
    $region14: #{_impl.1} parent=1 // pred_check
      _
    $region15: #{_impl.1} parent=1 // pred_check_branch
      %479 = sbr.rel (0) target = $region17
    $region16: #{_impl.1} parent=1 // pred_region
      %481 = vsyncadd [#allocation4], 0
      %s483 = sshll.u32 [#allocation5], 4
      %s484 = int_to_ptr.vmem [resolvable:$true] %s483
      %s485 = sshll.u32 %s2, 4
      %s486 = int_to_ptr.hbm [resolvable:$true] %s485
      %488 = dma.vmem_to_hbm [thread:$0]  %s484, 16, %s486, [#allocation4]
    $region17: #{_impl.1} parent=1 // pred_fallthru
      _
    // Predicated region
    $region18: #{_impl.1} parent=1 // pred_check
      _
    $region19: #{_impl.1} parent=1 // pred_check_branch
      %490 = sbr.rel (0) target = $region21
    $region20: #{_impl.1} parent=1 // pred_region
      %492 = dma.done [#allocation4], 16
    $region21: #{_impl.1} parent=1 // pred_fallthru
      _
    %493 = vsyncpa [#allocation3], 1
    %494 = vsyncpa [#allocation4], 1

</llo_original>
